<compile_context>
chip_gen: v7x
topology: tpu7x:2x2x1
jax: 0.10.0
libtpu: 0.0.40
codegen_flags: <defaults>
</compile_context>

<pallas_src>
import functools

import jax
import jax.numpy as jnp
from jax.experimental import pallas as pl
from jax.experimental.pallas import tpu as pltpu


def moodnet_kernel(x_ref, w1_ref, b1_ref, w2_ref, b2_ref, o_ref):
    """x: (TB, 7)  w1: (10, 7)  b1: (10, 1)  w2: (10, 1)  b2: (1,) in SMEM."""
    x = x_ref[...]                                # (TB, F) -- batch on sublanes
    w1 = w1_ref[...].astype(x.dtype)              # (H, F)
    # Layer 1 on the MXU: contract the feature axis of both operands so the
    # result is already batch-on-lanes:  h[h_idx, b] = sum_f w1[h_idx,f]*x[b,f]
    h = jnp.einsum("hf,bf->hb", w1, x, preferred_element_type=jnp.float32)
    h = jnp.maximum(h + b1_ref[...], 0.0)         # bias + ReLU on the VPU
    # Layer 2: output width is 1 -> keep it off the MXU.  Weighted sum over the
    # 10 sublane rows (VPU multiply + XLU cross-sublane reduce).
    y = jnp.sum(w2_ref[...] * h, axis=0, keepdims=True) + b2_ref[0]
    o_ref[...] = y.astype(o_ref.dtype)            # (1, TB) lane-dense store


def _round_up(n, m):
    return -(-n // m) * m


@functools.partial(
    jax.jit, static_argnames=("max_tile_b", "min_grid_steps", "use_bf16")
)
def moodnet_forward(x, w1, b1_col, w2_col, b2, *, max_tile_b=16384,
                    min_grid_steps=8, use_bf16=False):
    """x: (B, 7) f32 -> (B, 1) f32.

    Kernel-layout params: w1 (10, 7) [PyTorch layout, used as-is],
    b1_col (10, 1), w2_col (10, 1), b2 (1,).
    """
    B, F = x.shape
    H = w1.shape[0]

    if use_bf16:
        # Halves the dominant HBM read (28 -> 14 B/element); accumulation and
        # all post-matmul math stay f32.  Only a net win when this cast fuses
        # with an upstream producer (hence the jitted wrapper).  Loosen test
        # tolerances to ~1e-2 if enabled.
        x = x.astype(jnp.bfloat16)

    # Batch tile: multiple of 128 (lane-dense output blocks), large enough to
    # amortize the ~0.35us/step pipeline overhead, small enough that
    #  (a) the lane-padded (tile_b, 128)-wide f32 VMEM buffers (512*tile_b
    #      bytes each, up to 3-deep) stay well inside a 32 MiB budget on every
    #      generation (v7x only has 64 MiB physical VMEM), and
    #  (b) big batches still produce >= min_grid_steps tiles so the "parallel"
    #      axis can shard across v7x's two TensorCores and the DMA pipeline
    #      actually overlaps.
    tile_b = int(
        max(128, min(max_tile_b, _round_up(pl.cdiv(B, min_grid_steps), 128)))
    )
    num_tiles = pl.cdiv(B, tile_b)

    # Deeper input pipeline only when there is enough work to overlap.
    x_spec_kwargs = dict(pipeline_mode=pl.Buffered(3)) if num_tiles >= 3 else {}
    x_spec = pl.BlockSpec((tile_b, F), lambda i: (i, 0), **x_spec_kwargs)

    out = pl.pallas_call(
        moodnet_kernel,
        out_shape=jax.ShapeDtypeStruct((1, B), jnp.float32),
        grid_spec=pl.GridSpec(
            grid=(num_tiles,),
            in_specs=[
                x_spec,                                             # x tile (pipelined)
                pl.BlockSpec((H, F), lambda i: (0, 0)),             # w1 (resident)
                pl.BlockSpec((H, 1), lambda i: (0, 0)),             # b1 (resident)
                pl.BlockSpec((H, 1), lambda i: (0, 0)),             # w2 (resident)
                pl.BlockSpec(memory_space=pltpu.MemorySpace.SMEM),  # b2 scalar
            ],
            out_specs=pl.BlockSpec((1, tile_b), lambda i: (0, i)),
        ),
        compiler_params=pltpu.CompilerParams(
            # Batch tiles are independent -> allow TensorCore sharding (v7x).
            dimension_semantics=("parallel",),
            # Fits 3 x 8 MiB x-buffers + output double-buffer with headroom;
            # safe on v5e/v6e (128 MiB) and v7x (64 MiB physical).
            vmem_limit_bytes=32 * 1024 * 1024,
        ),
    )(x, w1, b1_col, w2_col, b2)

    # Pallas drops out-of-bounds lanes of the last partial block on writeback,
    # so `out` is exactly (1, B); reshape to PyTorch's (B, 1) (fused under jit).
    return out.reshape(B, 1)


def init_params(key):
    # PyTorch layer shapes: fc1 Linear(7,10) -> W (10,7), b (10,)
    #                       fc2 Linear(10,1) -> W (1,10), b (1,)
    k1, k2, k3, k4 = jax.random.split(key, 4)
    w1_pt = jax.random.uniform(k1, (10, 7), jnp.float32, -0.3, 0.3)
    b1_pt = jax.random.uniform(k2, (10,), jnp.float32, -0.3, 0.3)
    w2_pt = jax.random.uniform(k3, (1, 10), jnp.float32, -0.3, 0.3)
    b2_pt = jax.random.uniform(k4, (1,), jnp.float32, -0.3, 0.3)
    return w1_pt, b1_pt, w2_pt, b2_pt


if __name__ == "__main__":
    key = jax.random.PRNGKey(0)
    kx, kp = jax.random.split(key)

    B = 8
    x = jax.random.normal(kx, (B, 7), jnp.float32)
    w1_pt, b1_pt, w2_pt, b2_pt = init_params(kp)

    # Kernel layout: W1 stays (10,7); biases as columns; W2 transposed to (10,1).
    w1 = w1_pt
    b1_col = b1_pt.reshape(10, 1)
    w2_col = w2_pt.T            # (10, 1)
    b2 = b2_pt                  # (1,)

    out = moodnet_forward(x, w1, b1_col, w2_col, b2)
    out = jax.block_until_ready(out)

    # Pure-JAX reference with identical (PyTorch) semantics.
    ref = jnp.maximum(x @ w1_pt.T + b1_pt, 0.0) @ w2_pt.T + b2_pt
    assert out.shape == (B, 1)
    assert jnp.allclose(out, ref, atol=1e-5, rtol=1e-5)

    print("KERNEL_OK")
</pallas_src>

<mosaic_0001>
module attributes {stable_mosaic.version = 11 : i64} {
  func.func @moodnet_kernel(%arg0: i32, %arg1: memref<128x7xf32, #tpu.memory_space<vmem>>, %arg2: memref<10x7xf32, #tpu.memory_space<vmem>>, %arg3: memref<10x1xf32, #tpu.memory_space<vmem>>, %arg4: memref<10x1xf32, #tpu.memory_space<vmem>>, %arg5: memref<1xf32, #tpu.memory_space<smem>>, %arg6: memref<1x128xf32, #tpu.memory_space<vmem>>) attributes {dimension_semantics = [#tpu.dimension_semantics<parallel>], iteration_bounds = array<i64: 1>, scalar_prefetch = 0 : i64, scratch_operands = 0 : i64, tpu.core_type = #tpu.core_type<tc>, window_params = [{transform_indices = @transform_0, window_bounds = array<i64: 128, 7>}, {pipeline_mode = #tpu.pipeline_mode<synchronous>, transform_indices = @transform_1, window_bounds = array<i64: 10, 7>}, {pipeline_mode = #tpu.pipeline_mode<synchronous>, transform_indices = @transform_2, window_bounds = array<i64: 10, 1>}, {pipeline_mode = #tpu.pipeline_mode<synchronous>, transform_indices = @transform_3, window_bounds = array<i64: 10, 1>}, {transform_indices = @transform_4, window_bounds = array<i64: 1>}, {transform_indices = @transform_5, window_bounds = array<i64: 1, 128>}]} {
    %c0 = arith.constant 0 : index
    %c0_0 = arith.constant 0 : index
    %0 = vector.load %arg1[%c0, %c0_0] : memref<128x7xf32, #tpu.memory_space<vmem>>, vector<128x7xf32>
    %c0_1 = arith.constant 0 : index
    %c0_2 = arith.constant 0 : index
    %1 = vector.load %arg2[%c0_1, %c0_2] : memref<10x7xf32, #tpu.memory_space<vmem>>, vector<10x7xf32>
    "tpu.trace_start"() <{level = 10 : i32, message = "hf,bf->hb"}> : () -> ()
    %cst = arith.constant dense<0.000000e+00> : vector<10x128xf32>
    %2 = tpu.matmul %1, %0, %cst {dimension_numbers = #tpu.dot_dimension_numbers<[1], [1], [0], [0], [0, 0, 1, 0], [], []>} : vector<10x7xf32>, vector<128x7xf32>, vector<10x128xf32> -> vector<10x128xf32>
    "tpu.trace_stop"() : () -> ()
    %c0_3 = arith.constant 0 : index
    %c0_4 = arith.constant 0 : index
    %3 = vector.load %arg3[%c0_3, %c0_4] : memref<10x1xf32, #tpu.memory_space<vmem>>, vector<10x1xf32>
    %4 = vector.broadcast %3 : vector<10x1xf32> to vector<10x128xf32>
    %5 = arith.addf %2, %4 : vector<10x128xf32>
    %cst_5 = arith.constant 0.000000e+00 : f32
    %6 = vector.broadcast %cst_5 : f32 to vector<10x128xf32>
    %7 = arith.maximumf %5, %6 : vector<10x128xf32>
    %c0_6 = arith.constant 0 : index
    %c0_7 = arith.constant 0 : index
    %8 = vector.load %arg4[%c0_6, %c0_7] : memref<10x1xf32, #tpu.memory_space<vmem>>, vector<10x1xf32>
    %9 = vector.broadcast %8 : vector<10x1xf32> to vector<10x128xf32>
    %10 = arith.mulf %9, %7 : vector<10x128xf32>
    %cst_8 = arith.constant dense<0.000000e+00> : vector<128xf32>
    %11 = vector.multi_reduction <add>, %10, %cst_8 [0] : vector<10x128xf32> to vector<128xf32>
    %12 = vector.shape_cast %11 : vector<128xf32> to vector<1x128xf32>
    %c0_9 = arith.constant 0 : index
    %13 = memref.load %arg5[%c0_9] : memref<1xf32, #tpu.memory_space<smem>>
    %14 = vector.broadcast %13 : f32 to vector<1x128xf32>
    %15 = arith.addf %12, %14 : vector<1x128xf32>
    %c0_10 = arith.constant 0 : index
    %c0_11 = arith.constant 0 : index
    %16 = vector.load %arg6[%c0_10, %c0_11] : memref<1x128xf32, #tpu.memory_space<vmem>>, vector<1x128xf32>
    tpu.vector_store %arg6[%c0_10, %c0_11], %15 {strides = array<i32>} : memref<1x128xf32, #tpu.memory_space<vmem>>, vector<1x128xf32>,
    return
  }
  func.func @transform_0(%arg0: i32) -> (i32, i32) {
    %c0_i32 = arith.constant 0 : i32
    %c0_i32_0 = arith.constant 0 : i32
    return %arg0, %c0_i32 : i32, i32
  }
  func.func @transform_1(%arg0: i32) -> (i32, i32) {
    %c0_i32 = arith.constant 0 : i32
    %c0_i32_0 = arith.constant 0 : i32
    %c0_i32_1 = arith.constant 0 : i32
    return %c0_i32, %c0_i32_0 : i32, i32
  }
  func.func @transform_2(%arg0: i32) -> (i32, i32) {
    %c0_i32 = arith.constant 0 : i32
    %c0_i32_0 = arith.constant 0 : i32
    %c0_i32_1 = arith.constant 0 : i32
    return %c0_i32, %c0_i32_0 : i32, i32
  }
  func.func @transform_3(%arg0: i32) -> (i32, i32) {
    %c0_i32 = arith.constant 0 : i32
    %c0_i32_0 = arith.constant 0 : i32
    %c0_i32_1 = arith.constant 0 : i32
    return %c0_i32, %c0_i32_0 : i32, i32
  }
  func.func @transform_4(%arg0: i32) -> i32 {
    %c0_i32 = arith.constant 0 : i32
    %c0_i32_0 = arith.constant 0 : i32
    return %c0_i32 : i32
  }
  func.func @transform_5(%arg0: i32) -> (i32, i32) {
    %c0_i32 = arith.constant 0 : i32
    %c0_i32_0 = arith.constant 0 : i32
    return %c0_i32, %arg0 : i32, i32
  }
}

</mosaic_0001>

<llo_original>
// kernel: moodnet_forward.1
$region0: #{moodnet_forward.1}
  #allocation0 [shape = 'u32[]', space=smem, size = 0x4, offset = 0x4, fixed_abs, tag = 'smem constant byte address 0x4 - core index']
  #allocation1 [shape = 'u32[144,128]{1,0:T(1,128)}', space=vmem, size = 0x12000, scoped, tag = 'internal scratch']
  #allocation2 [shape = 'f32[1]{0:T(128)S(6)}', space=smem, size = 0x200, scoped, tag = 'scoped memory for moodnet_forward.1']
  %s0 = inlined_call_operand.vmem [shape: f32[8,7], index: 0, kind: input, shape index: {}]
  %s1 = inlined_call_operand.vmem [shape: f32[10,7], index: 1, kind: input, shape index: {}]
  %s2 = inlined_call_operand.vmem [shape: f32[10,1], index: 2, kind: input, shape index: {}]
  %s3 = inlined_call_operand.vmem [shape: f32[10,1], index: 3, kind: input, shape index: {}]
  %s4 = inlined_call_operand.<no memory space> [shape: f32[1], index: 4, kind: input, shape index: {}]
  %s5 = inlined_call_operand.hbm [shape: f32[1,8], index: 5, kind: output, shape index: {}]
  %s6 = sld [smem:[#allocation0]]
  $region30: #{moodnet_forward.1} parent=0
    _
  %s8 = ssub.s32 1, %s6
  %s9 = scalar_select 0, %s8, %s6
  %10 = sst [smem:[#allocation2]] %s4
  $region1: #{moodnet_forward.1} parent=0
    #allocation3 [shape = 'u8[512]{0}', space=vmem, size = 0x400, scoped, tag = 'output window, operand 0, single buffered']
    #allocation4 [shape = 's32[1]{0}', space=sflag, size = 0x4, scoped, tag = 'scoped memory for moodnet_forward.1']
    %11 = vsyncpa [#allocation4], 0
    // Predicated region
    $region2: #{moodnet_forward.1} parent=1 // pred_check
      _
    $region3: #{moodnet_forward.1} parent=1 // pred_check_branch
      %13 = sbr.rel (0) target = $region5
    $region4: #{moodnet_forward.1} parent=1 // pred_region
      _
    $region5: #{moodnet_forward.1} parent=1 // pred_fallthru
      _
    // Predicated region
    $region6: #{moodnet_forward.1} parent=1 // pred_check
      _
    $region7: #{moodnet_forward.1} parent=1 // pred_check_branch
      %15 = sbr.rel (0) target = $region9
    $region8: #{moodnet_forward.1} parent=1 // pred_region
      _
    $region9: #{moodnet_forward.1} parent=1 // pred_fallthru
      _
    // Predicated region
    $region10: #{moodnet_forward.1} parent=1 // pred_check
      _
    $region11: #{moodnet_forward.1} parent=1 // pred_check_branch
      %17 = sbr.rel (0) target = $region13
    $region12: #{moodnet_forward.1} parent=1 // pred_region
      _
    $region13: #{moodnet_forward.1} parent=1 // pred_fallthru
      _
    // Predicated region
    $region14: #{moodnet_forward.1} parent=1 // pred_check
      _
    $region15: #{moodnet_forward.1} parent=1 // pred_check_branch
      %19 = sbr.rel (0) target = $region17
    $region16: #{moodnet_forward.1} parent=1 // pred_region
      _
    $region17: #{moodnet_forward.1} parent=1 // pred_fallthru
      _
    // Predicated region
    $region18: #{moodnet_forward.1} parent=1 // pred_check
      _
    $region19: #{moodnet_forward.1} parent=1 // pred_check_branch
      %21 = sbr.rel (0) target = $region21
    $region20: #{moodnet_forward.1} parent=1 // pred_region
      _
    $region21: #{moodnet_forward.1} parent=1 // pred_fallthru
      _
    %v22 = vld [vmem:[%s0] sm:$0xff]
    %v23 = vld [vmem:[%s0 + $0x8] sm:$0xff]
    %v24 = vld [vmem:[%s0 + $0x10] sm:$0xff]
    %v25 = vld [vmem:[%s0 + $0x18] sm:$0xff]
    %v26 = vld [vmem:[%s0 + $0x20] sm:$0xff]
    %v27 = vld [vmem:[%s0 + $0x28] sm:$0xff]
    %v28 = vld [vmem:[%s0 + $0x30] sm:$0xff]
    %v29 = vld [vmem:[%s0 + $0x38] sm:$0xff]
    %v30 = vld [vmem:[%s0 + $0x40] sm:$0xff]
    %v31 = vld [vmem:[%s0 + $0x48] sm:$0xff]
    %v32 = vld [vmem:[%s0 + $0x50] sm:$0xff]
    %v33 = vld [vmem:[%s0 + $0x58] sm:$0xff]
    %v34 = vld [vmem:[%s0 + $0x60] sm:$0xff]
    %v35 = vld [vmem:[%s0 + $0x68] sm:$0xff]
    %v36 = vld [vmem:[%s0 + $0x70] sm:$0xff]
    %v37 = vld [vmem:[%s0 + $0x78] sm:$0xff]
    %v38 = vld [vmem:[%s1] sm:$0xff]
    %v39 = vld [vmem:[%s1 + $0x8] sm:$0x3]
    %v40 = vld [vmem:[%s2] sm:$0xff]
    %v41 = vld [vmem:[%s2 + $0x8] sm:$0x3]
    %43 = vset.pattern.permute.xlu0 0
    %44 = vperm.xlu0 %43, %v40
    %v45 = vpop.permute.xlu0 %44
    %48 = vset.pattern.permute.xlu0 0
    %49 = vperm.xlu0 %48, %v41
    %v50 = vpop.permute.xlu0 %49
    %vm52 = vcmask 56320
    %v54 = vsel %vm52, %v38, 0
    %v57 = vsel %vm52, %v39, 0
    %v60 = vsel %vm52, %v22, 0
    %v63 = vsel %vm52, %v23, 0
    %v66 = vsel %vm52, %v24, 0
    %v69 = vsel %vm52, %v25, 0
    %v72 = vsel %vm52, %v26, 0
    %v75 = vsel %vm52, %v27, 0
    %v78 = vsel %vm52, %v28, 0
    %v81 = vsel %vm52, %v29, 0
    %v84 = vsel %vm52, %v30, 0
    %v87 = vsel %vm52, %v31, 0
    %v90 = vsel %vm52, %v32, 0
    %v93 = vsel %vm52, %v33, 0
    %v96 = vsel %vm52, %v34, 0
    %v99 = vsel %vm52, %v35, 0
    %v102 = vsel %vm52, %v36, 0
    %v105 = vsel %vm52, %v37, 0
    %107 = vmatprep.subr.mxu0 0.0
    %108 = vmatpush1.xpose.msra.mxu0 %v60
    %109 = vmatprep.subr.mxu0 0.0
    %110 = vmatpush1.xpose.msra.mxu0 %v63
    %111 = vmatprep.subr.mxu0 0.0
    %112 = vmatpush1.xpose.msra.mxu0 %v66
    %113 = vmatprep.subr.mxu0 0.0
    %114 = vmatpush1.xpose.msra.mxu0 %v69
    %115 = vmatprep.subr.mxu0 0.0
    %116 = vmatpush1.xpose.msra.mxu0 %v72
    %117 = vmatprep.subr.mxu0 0.0
    %118 = vmatpush1.xpose.msra.mxu0 %v75
    %119 = vmatprep.subr.mxu0 0.0
    %120 = vmatpush1.xpose.msra.mxu0 %v78
    %121 = vmatprep.subr.mxu0 0.0
    %122 = vmatpush1.xpose.msra.mxu0 %v81
    %123 = vmatprep.subr.mxu0 0.0
    %124 = vmatpush1.xpose.msra.mxu0 %v84
    %125 = vmatprep.subr.mxu0 0.0
    %126 = vmatpush1.xpose.msra.mxu0 %v87
    %127 = vmatprep.subr.mxu0 0.0
    %128 = vmatpush1.xpose.msra.mxu0 %v90
    %129 = vmatprep.subr.mxu0 0.0
    %130 = vmatpush1.xpose.msra.mxu0 %v93
    %131 = vmatprep.subr.mxu0 0.0
    %132 = vmatpush1.xpose.msra.mxu0 %v96
    %133 = vmatprep.subr.mxu0 0.0
    %134 = vmatpush1.xpose.msra.mxu0 %v99
    %135 = vmatprep.subr.mxu0 0.0
    %136 = vmatpush1.xpose.msra.mxu0 %v102
    %137 = vmatprep.subr.mxu0 0.0
    %138 = vmatpush1.xpose.msra.mxu0 %v105
    %139 = vmatprep.subr.mxu0 0.0
    %140 = vmatpush1.xpose.msra.mxu0 0.0
    %141 = vmatprep.subr.mxu0 0.0
    %142 = vmatpush1.xpose.msra.mxu0 0.0
    %143 = vmatprep.subr.mxu0 0.0
    %144 = vmatpush1.xpose.msra.mxu0 0.0
    %145 = vmatprep.subr.mxu0 0.0
    %146 = vmatpush1.xpose.msra.mxu0 0.0
    %147 = vmatprep.subr.mxu0 0.0
    %148 = vmatpush1.xpose.msra.mxu0 0.0
    %149 = vmatprep.subr.mxu0 0.0
    %150 = vmatpush1.xpose.msra.mxu0 0.0
    %151 = vmatprep.subr.mxu0 0.0
    %152 = vmatpush1.xpose.msra.mxu0 0.0
    %153 = vmatprep.subr.mxu0 0.0
    %154 = vmatpush1.xpose.msra.mxu0 0.0
    %155 = vmatprep.subr.mxu0 0.0
    %156 = vmatpush1.xpose.msra.mxu0 0.0
    %157 = vmatprep.subr.mxu0 0.0
    %158 = vmatpush1.xpose.msra.mxu0 0.0
    %159 = vmatprep.subr.mxu0 0.0
    %160 = vmatpush1.xpose.msra.mxu0 0.0
    %161 = vmatprep.subr.mxu0 0.0
    %162 = vmatpush1.xpose.msra.mxu0 0.0
    %163 = vmatprep.subr.mxu0 0.0
    %164 = vmatpush1.xpose.msra.mxu0 0.0
    %165 = vmatprep.subr.mxu0 0.0
    %166 = vmatpush1.xpose.msra.mxu0 0.0
    %167 = vmatprep.subr.mxu0 0.0
    %168 = vmatpush1.xpose.msra.mxu0 0.0
    %169 = vmatprep.subr.mxu0 0.0
    %170 = vmatpush1.xpose.msra.mxu0 0.0
    %171 = vmatprep.mubr.f32.mxu0 0.0
    %172 = vmatmul.mubr.f32.gmra.mrb[0].mxu0 %v54
    %v173 = vpop.f32.mrb[0].mxu0
    %v174 = vadd.f32 %v45, %v173
    %v175 = vpop.f32.mrb[0].mxu0
    %176 = vmatprep.mubr.f32.mxu0 0.0
    %177 = vmatmul.mubr.f32.gmra.mrb[0].mxu0 %v57
    %v178 = vpop.f32.mrb[0].mxu0
    %v179 = vadd.f32 %v50, %v178
    %v180 = vpop.f32.mrb[0].mxu0
    %181 = vdwg.mxu0
    %v182 = vmax.f32 %v174, 0.0
    %v183 = vmax.f32 %v179, 0.0
    %v184 = vld [vmem:[%s3] sm:$0xff]
    %v185 = vld [vmem:[%s3 + $0x8] sm:$0x3]
    %187 = vset.pattern.permute.xlu0 0
    %188 = vperm.xlu0 %187, %v184
    %v189 = vpop.permute.xlu0 %188
    %192 = vset.pattern.permute.xlu0 0
    %193 = vperm.xlu0 %192, %v185
    %v194 = vpop.permute.xlu0 %193
    %v196 = vmul.f32 %v189, %v182
    %v197 = vmul.f32 %v194, %v183
    %vm198 = vcmask 1041408
    %v199 = vsel %vm198, %v197, 0.0
    %v200 = vadd.f32 %v196, %v199
    %v201 = vrot.slane %v200, 4
    %v202 = vadd.f32 %v200, %v201
    %v203 = vrot.slane %v202, 2
    %v204 = vadd.f32 %v202, %v203
    %v205 = vrot.slane %v204, 1
    %v206 = vadd.f32 %v204, %v205
    %s207 = sld [smem:[#allocation2]]
    %v208 = vstv %s207
    %v209 = vadd.f32 %v206, %v208
    %210 = vst [vmem:[#allocation3] sm:$0x1] %v209
    // Predicated region
    $region22: #{moodnet_forward.1} parent=1 // pred_check
      _
    $region23: #{moodnet_forward.1} parent=1 // pred_check_branch
      %212 = sbr.rel (0) target = $region25
    $region24: #{moodnet_forward.1} parent=1 // pred_region
      %s214 = ssub.s32 16, 16
      %215 = vsyncadd [#allocation4], %s214
      %s217 = sshll.u32 [#allocation3], 4
      %s218 = int_to_ptr.vmem [resolvable:$true] %s217
      %220 = dma.vmem_to_hbm [thread:$0]  %s218, 16, %s5, [#allocation4]
    $region25: #{moodnet_forward.1} parent=1 // pred_fallthru
      _
    // Predicated region
    $region26: #{moodnet_forward.1} parent=1 // pred_check
      _
    $region27: #{moodnet_forward.1} parent=1 // pred_check_branch
      %222 = sbr.rel (0) target = $region29
    $region28: #{moodnet_forward.1} parent=1 // pred_region
      %223 = dma.done [#allocation4], 16
    $region29: #{moodnet_forward.1} parent=1 // pred_fallthru
      _
    %224 = vsyncpa [#allocation4], 1

</llo_original>
